<compile_context>
chip_gen: v7x
topology: tpu7x:2x2x1
jax: 0.10.0
libtpu: 0.0.40
codegen_flags: <defaults>
</compile_context>

<pallas_src>
import jax
import jax.numpy as jnp
from jax.experimental import pallas as pl
from jax.experimental.pallas import tpu as pltpu


def _round_up(x, m):
    return ((x + m - 1) // m) * m


def _vmem_capacity_bytes():
    """Physical VMEM per TensorCore; conservative fallback if query fails."""
    try:
        info = pltpu.get_tpu_info()
        cap = getattr(info, "vmem_capacity_bytes", None)
        if cap:
            return int(cap)
    except Exception:
        pass
    return 64 << 20   # v7x per-TC size; safe lower bound for v5e/v6e too


def _vmem_estimate(tm, tk, H_pad, cb, ob):
    """Buffer budget: double-buffered streamed operands + scratch + temps."""
    return (2 * tm * H_pad * cb          # x tile
            + 2 * H_pad * tk * cb        # W1 slab
            + 2 * tk * H_pad * cb        # W2 slab
            + 2 * H_pad * 4              # effective bias
            + 2 * tm * H_pad * ob        # out tile
            + tm * H_pad * 4             # f32 accumulator scratch
            + tm * tk * (4 + cb))        # first-matmul intermediate + bf16 cast


def _ffn_kernel(x_ref, w1_ref, w2_ref, bias_ref, o_ref, acc_ref):
    # x_ref:   (tm, Hp)      token tile (compute dtype, e.g. bf16)
    # w1_ref:  (Hp, tk)      slab of W1 for this d_ff tile
    # w2_ref:  (tk, Hp)      slab of W2 for this d_ff tile
    # bias_ref:(1, Hp) f32   effective bias = b1 @ W2 + b2
    # o_ref:   (tm, Hp)      output tile
    # acc_ref: (tm, Hp) f32  VMEM accumulator, resident across the k axis
    k = pl.program_id(1)

    @pl.when(k == 0)
    def _():
        acc_ref[...] = jnp.zeros_like(acc_ref)

    # First matmul on this d_ff slab (full H contraction, f32 MXU accumulate).
    h = jnp.dot(x_ref[...], w1_ref[...], preferred_element_type=jnp.float32)

    # Partial contribution of this d_ff slab to the second matmul (f32 acc).
    acc_ref[...] += jnp.dot(h.astype(w2_ref.dtype), w2_ref[...],
                            preferred_element_type=jnp.float32)

    @pl.when(k == pl.num_programs(1) - 1)
    def _():
        o_ref[...] = (acc_ref[...] + bias_ref[...]).astype(o_ref.dtype)


def prepare_ffn_params(w1, b1, w2, b2, *, compute_dtype=jnp.bfloat16, tk=512):
    """One-time weight preparation (hoisted out of the hot path).

    Pads H to a multiple of 128 (lane-dense stores) and d_ff to a multiple of
    the d_ff tile tk, casts the weights to the compute dtype, and folds b1
    into an effective output bias:  bias_eff = b1 @ W2 + b2  (f32).
    """
    H, d_ff = w1.shape
    assert w2.shape == (d_ff, H) and b1.shape == (d_ff,) and b2.shape == (H,)

    H_pad = _round_up(H, 128)
    tk_eff = max(128, (min(tk, _round_up(d_ff, 128)) // 128) * 128)
    d_ff_pad = _round_up(d_ff, tk_eff)

    w1p = jnp.pad(w1, ((0, H_pad - H), (0, d_ff_pad - d_ff))).astype(compute_dtype)
    w2p = jnp.pad(w2, ((0, d_ff_pad - d_ff), (0, H_pad - H))).astype(compute_dtype)
    bias_eff = jnp.dot(b1.astype(jnp.float32), w2.astype(jnp.float32),
                       preferred_element_type=jnp.float32) + b2.astype(jnp.float32)
    bias_p = jnp.pad(bias_eff, (0, H_pad - H)).reshape(1, H_pad)

    return {"w1": w1p, "w2": w2p, "bias": bias_p,
            "H": H, "d_ff": d_ff, "H_pad": H_pad, "d_ff_pad": d_ff_pad,
            "tk": tk_eff, "compute_dtype": compute_dtype}


def feed_forward(x, params, *, tm=512, out_dtype=None, vmem_limit_bytes=None):
    """x: (B, S, H).  params: output of prepare_ffn_params()."""
    B, S, H = x.shape
    assert H == params["H"], "hidden size mismatch with prepared params"
    H_pad = params["H_pad"]
    d_ff_pad = params["d_ff_pad"]
    tk = params["tk"]
    compute_dtype = params["compute_dtype"]
    out_dtype = x.dtype if out_dtype is None else out_dtype

    M = B * S
    cb = jnp.dtype(compute_dtype).itemsize
    ob = jnp.dtype(out_dtype).itemsize

    # --- tile selection, capped by physical VMEM (respects v7x 64 MiB/TC) ---
    cap = _vmem_capacity_bytes()
    budget = cap - (6 << 20)                       # headroom for Mosaic scratch
    tm_eff = max(16, min(tm, _round_up(M, 16)))    # bf16: 16 sublanes per vreg
    tm_eff = _round_up(tm_eff, 16)
    while _vmem_estimate(tm_eff, tk, H_pad, cb, ob) > budget and tm_eff > 16:
        tm_eff = max(16, _round_up(tm_eff // 2, 16))   # shrink tm, keep tk
    M_pad = _round_up(M, tm_eff)

    if vmem_limit_bytes is None:
        est = _vmem_estimate(tm_eff, tk, H_pad, cb, ob)
        vmem_limit_bytes = int(min(max(est + est // 4 + (4 << 20), 32 << 20),
                                   cap - (2 << 20)))

    # --- activations only: zero-pad + cast (exact for a linear layer) -------
    x2d = jnp.pad(x.reshape(M, H),
                  ((0, M_pad - M), (0, H_pad - H))).astype(compute_dtype)

    grid = (M_pad // tm_eff, d_ff_pad // tk)

    out2d = pl.pallas_call(
        _ffn_kernel,
        out_shape=jax.ShapeDtypeStruct((M_pad, H_pad), out_dtype),
        grid_spec=pltpu.PrefetchScalarGridSpec(
            num_scalar_prefetch=0,
            grid=grid,
            in_specs=[
                pl.BlockSpec((tm_eff, H_pad), lambda i, k: (i, 0)),   # x tile
                pl.BlockSpec((H_pad, tk), lambda i, k: (0, k)),       # W1 slab
                pl.BlockSpec((tk, H_pad), lambda i, k: (k, 0)),       # W2 slab
                pl.BlockSpec((1, H_pad), lambda i, k: (0, 0)),        # bias_eff
            ],
            out_specs=pl.BlockSpec((tm_eff, H_pad), lambda i, k: (i, 0)),
            scratch_shapes=[pltpu.VMEM((tm_eff, H_pad), jnp.float32)],
        ),
        compiler_params=pltpu.CompilerParams(
            dimension_semantics=("parallel", "arbitrary"),
            vmem_limit_bytes=vmem_limit_bytes,
        ),
    )(x2d, params["w1"], params["w2"], params["bias"])

    return out2d[:M, :H].reshape(B, S, H)


def init_params(key, hidden_size, d_ff):
    """Deterministic init mimicking nn.Linear's U(-1/sqrt(fan_in), 1/sqrt(fan_in)).

    Weights are stored transposed vs PyTorch: W1 is (hidden, d_ff), W2 is (d_ff, hidden).
    """
    k1, k2, k3, k4 = jax.random.split(key, 4)
    bound1 = 1.0 / (hidden_size ** 0.5)
    bound2 = 1.0 / (d_ff ** 0.5)
    w1 = jax.random.uniform(k1, (hidden_size, d_ff), jnp.float32, -bound1, bound1)
    b1 = jax.random.uniform(k2, (d_ff,), jnp.float32, -bound1, bound1)
    w2 = jax.random.uniform(k3, (d_ff, hidden_size), jnp.float32, -bound2, bound2)
    b2 = jax.random.uniform(k4, (hidden_size,), jnp.float32, -bound2, bound2)
    return w1, b1, w2, b2


def _reference_mixed(x, w1, b1, w2, b2, compute_dtype):
    """Pure-JAX reference replicating the kernel's math: bf16 matmul operands,
    f32 accumulation, bf16 rounding of the intermediate, and b1 folded into an
    f32 effective bias."""
    B, S, H = x.shape
    x2d = x.reshape(-1, H).astype(compute_dtype)
    h = jnp.dot(x2d, w1.astype(compute_dtype),
                preferred_element_type=jnp.float32).astype(compute_dtype)
    bias_eff = jnp.dot(b1.astype(jnp.float32), w2.astype(jnp.float32),
                       preferred_element_type=jnp.float32) + b2.astype(jnp.float32)
    y = jnp.dot(h, w2.astype(compute_dtype),
                preferred_element_type=jnp.float32) + bias_eff
    return y.reshape(B, S, H).astype(x.dtype)


if __name__ == "__main__":
    key = jax.random.PRNGKey(0)
    kx, kp, kx2, kp2 = jax.random.split(key, 4)

    # --- Test 1: small shapes consistent with the module --------------------
    B, S, H, D_FF = 2, 8, 32, 128
    x = jax.random.normal(kx, (B, S, H), jnp.float32)
    w1, b1, w2, b2 = init_params(kp, H, D_FF)
    params = prepare_ffn_params(w1, b1, w2, b2)

    out = jax.block_until_ready(feed_forward(x, params))
    assert out.shape == (B, S, H)

    # Tight check vs a reference doing the same mixed-precision math.
    ref_mixed = _reference_mixed(x, w1, b1, w2, b2, jnp.bfloat16)
    assert jnp.allclose(out, ref_mixed, atol=2e-3, rtol=2e-3), \
        "mismatch vs mixed-precision reference (test 1)"

    # Loose check vs the pure-f32 PyTorch-equivalent forward.
    ref_f32 = ((x.reshape(-1, H) @ w1 + b1) @ w2 + b2).reshape(B, S, H)
    assert jnp.allclose(out, ref_f32, atol=1e-1, rtol=1e-1), \
        "mismatch vs f32 reference (test 1)"

    # --- Test 2: exercise multi-tile grid (M and d_ff axes) + M padding ------
    B2, S2, H2, DF2 = 2, 40, 64, 2048       # module-default d_ff
    x2 = jax.random.normal(kx2, (B2, S2, H2), jnp.float32)
    w1b, b1b, w2b, b2b = init_params(kp2, H2, DF2)
    params2 = prepare_ffn_params(w1b, b1b, w2b, b2b)      # tk=512 -> 4 k steps
    out2 = jax.block_until_ready(feed_forward(x2, params2, tm=32))  # 3 row tiles
    assert out2.shape == (B2, S2, H2)
    ref2 = _reference_mixed(x2, w1b, b1b, w2b, b2b, jnp.bfloat16)
    assert jnp.allclose(out2, ref2, atol=5e-3, rtol=5e-3), \
        "mismatch vs mixed-precision reference (test 2)"

    print("KERNEL_OK")
</pallas_src>

<mosaic_0001>
module attributes {stable_mosaic.version = 11 : i64} {
  func.func @_ffn_kernel(%arg0: i32, %arg1: i32, %arg2: memref<16x128xbf16, #tpu.memory_space<vmem>>, %arg3: memref<128x128xbf16, #tpu.memory_space<vmem>>, %arg4: memref<128x128xbf16, #tpu.memory_space<vmem>>, %arg5: memref<1x128xf32, #tpu.memory_space<vmem>>, %arg6: memref<16x128xf32, #tpu.memory_space<vmem>>, %arg7: memref<16x128xf32, #tpu.memory_space<vmem>>) attributes {dimension_semantics = [#tpu.dimension_semantics<parallel>, #tpu.dimension_semantics<arbitrary>], iteration_bounds = array<i64: 1, 1>, scalar_prefetch = 0 : i64, scratch_operands = 1 : i64, tpu.core_type = #tpu.core_type<tc>, window_params = [{transform_indices = @transform_0, window_bounds = array<i64: 16, 128>}, {transform_indices = @transform_1, window_bounds = array<i64: 128, 128>}, {transform_indices = @transform_2, window_bounds = array<i64: 128, 128>}, {pipeline_mode = #tpu.pipeline_mode<synchronous>, transform_indices = @transform_3, window_bounds = array<i64: 1, 128>}, {transform_indices = @transform_4, window_bounds = array<i64: 16, 128>}]} {
    %c0_i32 = arith.constant 0 : i32
    %0 = arith.cmpi eq, %arg1, %c0_i32 : i32
    %1 = arith.extui %0 : i1 to i32
    %c0_i32_0 = arith.constant 0 : i32
    %2 = arith.cmpi ne, %1, %c0_i32_0 : i32
    scf.if %2 {
      %cst_13 = arith.constant 0.000000e+00 : f32
      %15 = vector.broadcast %cst_13 : f32 to vector<16x128xf32>
      %c0_14 = arith.constant 0 : index
      %c0_15 = arith.constant 0 : index
      %16 = vector.load %arg7[%c0_14, %c0_15] : memref<16x128xf32, #tpu.memory_space<vmem>>, vector<16x128xf32>
      tpu.vector_store %arg7[%c0_14, %c0_15], %15 {strides = array<i32>} : memref<16x128xf32, #tpu.memory_space<vmem>>, vector<16x128xf32>,
    } else {
    }
    %c0 = arith.constant 0 : index
    %c0_1 = arith.constant 0 : index
    %3 = vector.load %arg2[%c0, %c0_1] : memref<16x128xbf16, #tpu.memory_space<vmem>>, vector<16x128xbf16>
    %c0_2 = arith.constant 0 : index
    %c0_3 = arith.constant 0 : index
    %4 = vector.load %arg3[%c0_2, %c0_3] : memref<128x128xbf16, #tpu.memory_space<vmem>>, vector<128x128xbf16>
    %cst = arith.constant dense<0.000000e+00> : vector<16x128xf32>
    %5 = tpu.matmul %3, %4, %cst {dimension_numbers = #tpu.dot_dimension_numbers<[1], [0], [0], [1], [0, 0, 1, 1], [], []>} : vector<16x128xbf16>, vector<128x128xbf16>, vector<16x128xf32> -> vector<16x128xf32>
    %c0_4 = arith.constant 0 : index
    %c0_5 = arith.constant 0 : index
    %6 = vector.load %arg7[%c0_4, %c0_5] : memref<16x128xf32, #tpu.memory_space<vmem>>, vector<16x128xf32>
    %7 = arith.truncf %5 : vector<16x128xf32> to vector<16x128xbf16>
    %c0_6 = arith.constant 0 : index
    %c0_7 = arith.constant 0 : index
    %8 = vector.load %arg4[%c0_6, %c0_7] : memref<128x128xbf16, #tpu.memory_space<vmem>>, vector<128x128xbf16>
    %cst_8 = arith.constant dense<0.000000e+00> : vector<16x128xf32>
    %9 = tpu.matmul %7, %8, %cst_8 {dimension_numbers = #tpu.dot_dimension_numbers<[1], [0], [0], [1], [0, 0, 1, 1], [], []>} : vector<16x128xbf16>, vector<128x128xbf16>, vector<16x128xf32> -> vector<16x128xf32>
    %10 = arith.addf %6, %9 : vector<16x128xf32>
    %c0_9 = arith.constant 0 : index
    %c0_10 = arith.constant 0 : index
    %11 = vector.load %arg7[%c0_9, %c0_10] : memref<16x128xf32, #tpu.memory_space<vmem>>, vector<16x128xf32>
    tpu.vector_store %arg7[%c0_9, %c0_10], %10 {strides = array<i32>} : memref<16x128xf32, #tpu.memory_space<vmem>>, vector<16x128xf32>,
    %c0_i32_11 = arith.constant 0 : i32
    %12 = arith.cmpi eq, %arg1, %c0_i32_11 : i32
    %13 = arith.extui %12 : i1 to i32
    %c0_i32_12 = arith.constant 0 : i32
    %14 = arith.cmpi ne, %13, %c0_i32_12 : i32
    scf.if %14 {
      %c0_13 = arith.constant 0 : index
      %c0_14 = arith.constant 0 : index
      %15 = vector.load %arg7[%c0_13, %c0_14] : memref<16x128xf32, #tpu.memory_space<vmem>>, vector<16x128xf32>
      %c0_15 = arith.constant 0 : index
      %c0_16 = arith.constant 0 : index
      %16 = vector.load %arg5[%c0_15, %c0_16] : memref<1x128xf32, #tpu.memory_space<vmem>>, vector<1x128xf32>
      %17 = vector.broadcast %16 : vector<1x128xf32> to vector<16x128xf32>
      %18 = arith.addf %15, %17 : vector<16x128xf32>
      %c0_17 = arith.constant 0 : index
      %c0_18 = arith.constant 0 : index
      %19 = vector.load %arg6[%c0_17, %c0_18] : memref<16x128xf32, #tpu.memory_space<vmem>>, vector<16x128xf32>
      tpu.vector_store %arg6[%c0_17, %c0_18], %18 {strides = array<i32>} : memref<16x128xf32, #tpu.memory_space<vmem>>, vector<16x128xf32>,
    } else {
    }
    return
  }
  func.func @transform_0(%arg0: i32, %arg1: i32) -> (i32, i32) {
    %c0_i32 = arith.constant 0 : i32
    %c0_i32_0 = arith.constant 0 : i32
    return %arg0, %c0_i32 : i32, i32
  }
  func.func @transform_1(%arg0: i32, %arg1: i32) -> (i32, i32) {
    %c0_i32 = arith.constant 0 : i32
    %c0_i32_0 = arith.constant 0 : i32
    return %c0_i32, %arg1 : i32, i32
  }
  func.func @transform_2(%arg0: i32, %arg1: i32) -> (i32, i32) {
    %c0_i32 = arith.constant 0 : i32
    %c0_i32_0 = arith.constant 0 : i32
    return %arg1, %c0_i32 : i32, i32
  }
  func.func @transform_3(%arg0: i32, %arg1: i32) -> (i32, i32) {
    %c0_i32 = arith.constant 0 : i32
    %c0_i32_0 = arith.constant 0 : i32
    %c0_i32_1 = arith.constant 0 : i32
    return %c0_i32, %c0_i32_0 : i32, i32
  }
  func.func @transform_4(%arg0: i32, %arg1: i32) -> (i32, i32) {
    %c0_i32 = arith.constant 0 : i32
    %c0_i32_0 = arith.constant 0 : i32
    return %arg0, %c0_i32 : i32, i32
  }
}

</mosaic_0001>

<llo_original>
// kernel: tpu_custom_call.1
$region0: #{tpu_custom_call.1}
  #allocation0 [shape = 'u32[]', space=smem, size = 0x4, offset = 0x4, fixed_abs, tag = 'smem constant byte address 0x4 - core index']
  #allocation1 [shape = 'u32[144,128]{1,0:T(1,128)}', space=vmem, size = 0x12000, scoped, tag = 'internal scratch']
  #allocation2 [shape = 'f32[16,128]{1,0:T(8,128)}', space=vmem, size = 0x2000, scoped, tag = 'scratch operand']
  %s0 = inlined_call_operand.hbm [shape: bf16[16,128], index: 0, kind: input, shape index: {}]
  %s1 = inlined_call_operand.hbm [shape: bf16[128,128], index: 1, kind: input, shape index: {}]
  %s2 = inlined_call_operand.hbm [shape: bf16[128,128], index: 2, kind: input, shape index: {}]
  %s3 = inlined_call_operand.vmem [shape: f32[1,128], index: 3, kind: input, shape index: {}]
  %s4 = inlined_call_operand.hbm [shape: f32[16,128], index: 4, kind: output, shape index: {}]
  %s5 = sld [smem:[#allocation0]]
  $region46: #{tpu_custom_call.1} parent=0
    _
  %s7 = ssub.s32 1, %s5
  %s8 = scalar_select 0, %s7, %s5
  $region1: #{tpu_custom_call.1} parent=0
    #allocation3 [shape = 'u8[4096]{0}', space=vmem, size = 0x1000, scoped, tag = 'input window, operand 0, single buffered']
    #allocation4 [shape = 's32[1]{0}', space=sflag, size = 0x4, scoped, tag = 'scoped memory for tpu_custom_call.1']
    #allocation5 [shape = 's32[1]{0}', space=sflag, size = 0x4, scoped, tag = 'scoped memory for tpu_custom_call.1']
    #allocation6 [shape = 'u8[32768]{0}', space=vmem, size = 0x8000, scoped, tag = 'input window, operand 1, single buffered']
    #allocation7 [shape = 's32[1]{0}', space=sflag, size = 0x4, scoped, tag = 'scoped memory for tpu_custom_call.1']
    #allocation8 [shape = 'u8[32768]{0}', space=vmem, size = 0x8000, scoped, tag = 'input window, operand 2, single buffered']
    #allocation9 [shape = 'u8[8192]{0}', space=vmem, size = 0x2000, scoped, tag = 'output window, operand 0, single buffered']
    %9 = vsyncpa [#allocation4], 0
    %10 = vsyncpa [#allocation7], 0
    %11 = vsyncpa [#allocation5], 0
    // Predicated region
    $region2: #{tpu_custom_call.1} parent=1 // pred_check
      _
    $region3: #{tpu_custom_call.1} parent=1 // pred_check_branch
      %13 = sbr.rel (0) target = $region5
    $region4: #{tpu_custom_call.1} parent=1 // pred_region
      %s15 = ssub.s32 128, 128
      %16 = vsyncadd [#allocation4], %s15
      %s17 = sshll.u32 [#allocation3], 4
      %s18 = int_to_ptr.vmem [resolvable:$true] %s17
      %23 = dma.hbm_to_vmem [thread:$0]  %s0, 128, %s18, [#allocation4], 64, 64, 4
    $region5: #{tpu_custom_call.1} parent=1 // pred_fallthru
      _
    // Predicated region
    $region6: #{tpu_custom_call.1} parent=1 // pred_check
      _
    $region7: #{tpu_custom_call.1} parent=1 // pred_check_branch
      %25 = sbr.rel (0) target = $region9
    $region8: #{tpu_custom_call.1} parent=1 // pred_region
      %s27 = ssub.s32 1024, 1024
      %28 = vsyncadd [#allocation7], %s27
      %s29 = sshll.u32 [#allocation6], 4
      %s30 = int_to_ptr.vmem [resolvable:$true] %s29
      %35 = dma.hbm_to_vmem [thread:$0]  %s1, 1024, %s30, [#allocation7], 64, 64, 4
    $region9: #{tpu_custom_call.1} parent=1 // pred_fallthru
      _
    // Predicated region
    $region10: #{tpu_custom_call.1} parent=1 // pred_check
      _
    $region11: #{tpu_custom_call.1} parent=1 // pred_check_branch
      %37 = sbr.rel (0) target = $region13
    $region12: #{tpu_custom_call.1} parent=1 // pred_region
      %s39 = ssub.s32 1024, 1024
      %40 = vsyncadd [#allocation7], %s39
      %s41 = sshll.u32 [#allocation8], 4
      %s42 = int_to_ptr.vmem [resolvable:$true] %s41
      %47 = dma.hbm_to_vmem [thread:$0]  %s2, 1024, %s42, [#allocation7], 64, 64, 4
    $region13: #{tpu_custom_call.1} parent=1 // pred_fallthru
      _
    // Predicated region
    $region14: #{tpu_custom_call.1} parent=1 // pred_check
      _
    $region15: #{tpu_custom_call.1} parent=1 // pred_check_branch
      %49 = sbr.rel (0) target = $region17
    $region16: #{tpu_custom_call.1} parent=1 // pred_region
      _
    $region17: #{tpu_custom_call.1} parent=1 // pred_fallthru
      _
    // Predicated region
    $region18: #{tpu_custom_call.1} parent=1 // pred_check
      _
    $region19: #{tpu_custom_call.1} parent=1 // pred_check_branch
      %51 = sbr.rel (0) target = $region21
    $region20: #{tpu_custom_call.1} parent=1 // pred_region
      %52 = dma.done [#allocation4], 128
    $region21: #{tpu_custom_call.1} parent=1 // pred_fallthru
      _
    // Predicated region
    $region22: #{tpu_custom_call.1} parent=1 // pred_check
      _
    $region23: #{tpu_custom_call.1} parent=1 // pred_check_branch
      %54 = sbr.rel (0) target = $region25
    $region24: #{tpu_custom_call.1} parent=1 // pred_region
      %55 = dma.done [#allocation7], 1024
    $region25: #{tpu_custom_call.1} parent=1 // pred_fallthru
      _
    // Predicated region
    $region26: #{tpu_custom_call.1} parent=1 // pred_check
      _
    $region27: #{tpu_custom_call.1} parent=1 // pred_check_branch
      %57 = sbr.rel (0) target = $region29
    $region28: #{tpu_custom_call.1} parent=1 // pred_region
      %58 = dma.done [#allocation7], 1024
    $region29: #{tpu_custom_call.1} parent=1 // pred_fallthru
      _
    %p60 = scmp.eq.s32.totalorder 0, 0
    // Predicated region
    $region30: #{tpu_custom_call.1} parent=1 // pred_check
      %p61 = pneg %p60
    $region31: #{tpu_custom_call.1} parent=1 // pred_check_branch
      %63 = sbr.rel (%p61) target = $region33
    $region32: #{tpu_custom_call.1} parent=1 // pred_region
      %64 = vst [vmem:[#allocation2] sm:$0xff] 0.0
      %65 = vst [vmem:[#allocation2 + $0x8] sm:$0xff] 0.0
    $region33: #{tpu_custom_call.1} parent=1 // pred_fallthru
      _
    %v66 = vld [vmem:[#allocation3] sm:$0xf]
    %v67 = vld [vmem:[#allocation3 + $0x4] sm:$0xf]
    %v68 = vld [vmem:[#allocation6] sm:$0xf]
    %v69 = vld [vmem:[#allocation6 + $0x4] sm:$0xf]
    %v70 = vld [vmem:[#allocation6 + $0x8] sm:$0xf]
    %v71 = vld [vmem:[#allocation6 + $0xc] sm:$0xf]
    %v72 = vld [vmem:[#allocation6 + $0x10] sm:$0xf]
    %v73 = vld [vmem:[#allocation6 + $0x14] sm:$0xf]
    %v74 = vld [vmem:[#allocation6 + $0x18] sm:$0xf]
    %v75 = vld [vmem:[#allocation6 + $0x1c] sm:$0xf]
    %v76 = vld [vmem:[#allocation6 + $0x20] sm:$0xf]
    %v77 = vld [vmem:[#allocation6 + $0x24] sm:$0xf]
    %v78 = vld [vmem:[#allocation6 + $0x28] sm:$0xf]
    %v79 = vld [vmem:[#allocation6 + $0x2c] sm:$0xf]
    %v80 = vld [vmem:[#allocation6 + $0x30] sm:$0xf]
    %v81 = vld [vmem:[#allocation6 + $0x34] sm:$0xf]
    %v82 = vld [vmem:[#allocation6 + $0x38] sm:$0xf]
    %v83 = vld [vmem:[#allocation6 + $0x3c] sm:$0xf]
    %v86 = vunpack.c.l.b16 %v66
    %v87 = vunpack.c.l.b16 %v67
    %v88 = vpack.c.b16 %v87, %v86
    %v106 = vunpack.c.l.b16 %v68
    %v107 = vunpack.c.l.b16 %v69
    %v108 = vunpack.c.l.b16 %v70
    %v109 = vunpack.c.l.b16 %v71
    %v110 = vunpack.c.l.b16 %v72
    %v111 = vunpack.c.l.b16 %v73
    %v112 = vunpack.c.l.b16 %v74
    %v113 = vunpack.c.l.b16 %v75
    %v114 = vunpack.c.l.b16 %v76
    %v115 = vunpack.c.l.b16 %v77
    %v116 = vunpack.c.l.b16 %v78
    %v117 = vunpack.c.l.b16 %v79
    %v118 = vunpack.c.l.b16 %v80
    %v119 = vunpack.c.l.b16 %v81
    %v120 = vunpack.c.l.b16 %v82
    %v121 = vunpack.c.l.b16 %v83
    %v122 = vpack.c.b16 %v107, %v106
    %v123 = vpack.c.b16 %v109, %v108
    %v124 = vpack.c.b16 %v111, %v110
    %v125 = vpack.c.b16 %v113, %v112
    %v126 = vpack.c.b16 %v115, %v114
    %v127 = vpack.c.b16 %v117, %v116
    %v128 = vpack.c.b16 %v119, %v118
    %v129 = vpack.c.b16 %v121, %v120
    %138 = vmatprep.subr.bf16.mxu0 0
    %139 = vmatpush1.bf16.msra.mxu0 %v122
    %140 = vmatprep.subr.bf16.mxu0 0
    %141 = vmatpush1.bf16.msra.mxu0 %v123
    %142 = vmatprep.subr.bf16.mxu0 0
    %143 = vmatpush1.bf16.msra.mxu0 %v124
    %144 = vmatprep.subr.bf16.mxu0 0
    %145 = vmatpush1.bf16.msra.mxu0 %v125
    %146 = vmatprep.subr.bf16.mxu0 0
    %147 = vmatpush1.bf16.msra.mxu0 %v126
    %148 = vmatprep.subr.bf16.mxu0 0
    %149 = vmatpush1.bf16.msra.mxu0 %v127
    %150 = vmatprep.subr.bf16.mxu0 0
    %151 = vmatpush1.bf16.msra.mxu0 %v128
    %152 = vmatprep.subr.bf16.mxu0 0
    %153 = vmatpush1.bf16.msra.mxu0 %v129
    %154 = vmatprep.subr.bf16.mxu0 0
    %155 = vmatpush1.bf16.msra.mxu0 0
    %156 = vmatprep.subr.bf16.mxu0 0
    %157 = vmatpush1.bf16.msra.mxu0 0
    %158 = vmatprep.subr.bf16.mxu0 0
    %159 = vmatpush1.bf16.msra.mxu0 0
    %160 = vmatprep.subr.bf16.mxu0 0
    %161 = vmatpush1.bf16.msra.mxu0 0
    %162 = vmatprep.subr.bf16.mxu0 0
    %163 = vmatpush1.bf16.msra.mxu0 0
    %164 = vmatprep.subr.bf16.mxu0 0
    %165 = vmatpush1.bf16.msra.mxu0 0
    %166 = vmatprep.subr.bf16.mxu0 0
    %167 = vmatpush1.bf16.msra.mxu0 0
    %168 = vmatprep.subr.bf16.mxu0 0
    %169 = vmatpush1.bf16.msra.mxu0 0
    %170 = vmatprep.mubr.bf16.mxu0 0
    %171 = vmatmul.mubr.bf16.gmra.mrb[0].mxu0 %v88
    %v172 = vpop.f32.mrb[0].mxu0
    %v173 = vadd.f32 0.0, %v172
    %v174 = vpop.f32.mrb[0].mxu0
    %v175 = vpop.f32.mrb[0].mxu0
    %v176 = vadd.f32 0.0, %v175
    %v177 = vpop.f32.mrb[0].mxu0
    %178 = vdwg.mxu0
    %v179 = vld [vmem:[#allocation2] sm:$0xff]
    %v180 = vld [vmem:[#allocation2 + $0x8] sm:$0xff]
    %v181 = vpack.c.bf16 %v176, %v173
    %v182 = vld [vmem:[#allocation8] sm:$0xf]
    %v183 = vld [vmem:[#allocation8 + $0x4] sm:$0xf]
    %v184 = vld [vmem:[#allocation8 + $0x8] sm:$0xf]
    %v185 = vld [vmem:[#allocation8 + $0xc] sm:$0xf]
    %v186 = vld [vmem:[#allocation8 + $0x10] sm:$0xf]
    %v187 = vld [vmem:[#allocation8 + $0x14] sm:$0xf]
    %v188 = vld [vmem:[#allocation8 + $0x18] sm:$0xf]
    %v189 = vld [vmem:[#allocation8 + $0x1c] sm:$0xf]
    %v190 = vld [vmem:[#allocation8 + $0x20] sm:$0xf]
    %v191 = vld [vmem:[#allocation8 + $0x24] sm:$0xf]
    %v192 = vld [vmem:[#allocation8 + $0x28] sm:$0xf]
    %v193 = vld [vmem:[#allocation8 + $0x2c] sm:$0xf]
    %v194 = vld [vmem:[#allocation8 + $0x30] sm:$0xf]
    %v195 = vld [vmem:[#allocation8 + $0x34] sm:$0xf]
    %v196 = vld [vmem:[#allocation8 + $0x38] sm:$0xf]
    %v197 = vld [vmem:[#allocation8 + $0x3c] sm:$0xf]
    %v214 = vunpack.c.l.b16 %v182
    %v215 = vunpack.c.l.b16 %v183
    %v216 = vunpack.c.l.b16 %v184
    %v217 = vunpack.c.l.b16 %v185
    %v218 = vunpack.c.l.b16 %v186
    %v219 = vunpack.c.l.b16 %v187
    %v220 = vunpack.c.l.b16 %v188
    %v221 = vunpack.c.l.b16 %v189
    %v222 = vunpack.c.l.b16 %v190
    %v223 = vunpack.c.l.b16 %v191
    %v224 = vunpack.c.l.b16 %v192
    %v225 = vunpack.c.l.b16 %v193
    %v226 = vunpack.c.l.b16 %v194
    %v227 = vunpack.c.l.b16 %v195
    %v228 = vunpack.c.l.b16 %v196
    %v229 = vunpack.c.l.b16 %v197
    %v230 = vpack.c.b16 %v215, %v214
    %v231 = vpack.c.b16 %v217, %v216
    %v232 = vpack.c.b16 %v219, %v218
    %v233 = vpack.c.b16 %v221, %v220
    %v234 = vpack.c.b16 %v223, %v222
    %v235 = vpack.c.b16 %v225, %v224
    %v236 = vpack.c.b16 %v227, %v226
    %v237 = vpack.c.b16 %v229, %v228
    %246 = vmatprep.subr.bf16.mxu0 0
    %247 = vmatpush1.bf16.msra.mxu0 %v230
    %248 = vmatprep.subr.bf16.mxu0 0
    %249 = vmatpush1.bf16.msra.mxu0 %v231
    %250 = vmatprep.subr.bf16.mxu0 0
    %251 = vmatpush1.bf16.msra.mxu0 %v232
    %252 = vmatprep.subr.bf16.mxu0 0
    %253 = vmatpush1.bf16.msra.mxu0 %v233
    %254 = vmatprep.subr.bf16.mxu0 0
    %255 = vmatpush1.bf16.msra.mxu0 %v234
    %256 = vmatprep.subr.bf16.mxu0 0
    %257 = vmatpush1.bf16.msra.mxu0 %v235
    %258 = vmatprep.subr.bf16.mxu0 0
    %259 = vmatpush1.bf16.msra.mxu0 %v236
    %260 = vmatprep.subr.bf16.mxu0 0
    %261 = vmatpush1.bf16.msra.mxu0 %v237
    %262 = vmatprep.subr.bf16.mxu0 0
    %263 = vmatpush1.bf16.msra.mxu0 0
    %264 = vmatprep.subr.bf16.mxu0 0
    %265 = vmatpush1.bf16.msra.mxu0 0
    %266 = vmatprep.subr.bf16.mxu0 0
    %267 = vmatpush1.bf16.msra.mxu0 0
    %268 = vmatprep.subr.bf16.mxu0 0
    %269 = vmatpush1.bf16.msra.mxu0 0
    %270 = vmatprep.subr.bf16.mxu0 0
    %271 = vmatpush1.bf16.msra.mxu0 0
    %272 = vmatprep.subr.bf16.mxu0 0
    %273 = vmatpush1.bf16.msra.mxu0 0
    %274 = vmatprep.subr.bf16.mxu0 0
    %275 = vmatpush1.bf16.msra.mxu0 0
    %276 = vmatprep.subr.bf16.mxu0 0
    %277 = vmatpush1.bf16.msra.mxu0 0
    %278 = vmatprep.mubr.bf16.mxu0 0
    %279 = vmatmul.mubr.bf16.gmra.mrb[0].mxu0 %v181
    %v280 = vpop.f32.mrb[0].mxu0
    %v281 = vadd.f32 0.0, %v280
    %v282 = vpop.f32.mrb[0].mxu0
    %v283 = vpop.f32.mrb[0].mxu0
    %v284 = vadd.f32 0.0, %v283
    %v285 = vpop.f32.mrb[0].mxu0
    %286 = vdwg.mxu0
    %v287 = vadd.f32 %v179, %v281
    %v288 = vadd.f32 %v180, %v284
    %289 = vst [vmem:[#allocation2] sm:$0xff] %v287
    %290 = vst [vmem:[#allocation2 + $0x8] sm:$0xff] %v288
    // Predicated region
    $region34: #{tpu_custom_call.1} parent=1 // pred_check
      %p291 = pneg %p60
    $region35: #{tpu_custom_call.1} parent=1 // pred_check_branch
      %293 = sbr.rel (%p291) target = $region37
    $region36: #{tpu_custom_call.1} parent=1 // pred_region
      %v294 = vld [vmem:[#allocation2] sm:$0xff]
      %v295 = vld [vmem:[#allocation2 + $0x8] sm:$0xff]
      %v296 = vld [vmem:[%s3] sm:$0x1]
      %v298 = vlaneseq
      %v299 = vshrl.u32 %v298, 7
      %v300 = vsub.s32 0, %v299
      %v301 = vrot.slane %v296, %v300
      %v303 = vadd.f32 %v294, %v301
      %v304 = vadd.f32 %v295, %v301
      %305 = vst [vmem:[#allocation9] sm:$0xff] %v303
      %306 = vst [vmem:[#allocation9 + $0x8] sm:$0xff] %v304
    $region37: #{tpu_custom_call.1} parent=1 // pred_fallthru
      _
    // Predicated region
    $region38: #{tpu_custom_call.1} parent=1 // pred_check
      _
    $region39: #{tpu_custom_call.1} parent=1 // pred_check_branch
      %308 = sbr.rel (0) target = $region41
    $region40: #{tpu_custom_call.1} parent=1 // pred_region
      %s310 = ssub.s32 256, 256
      %311 = vsyncadd [#allocation5], %s310
      %s312 = sshll.u32 [#allocation9], 4
      %s313 = int_to_ptr.vmem [resolvable:$true] %s312
      %318 = dma.vmem_to_hbm [thread:$0]  %s313, 256, %s4, [#allocation5], 128, 128, 8
    $region41: #{tpu_custom_call.1} parent=1 // pred_fallthru
      _
    // Predicated region
    $region42: #{tpu_custom_call.1} parent=1 // pred_check
      _
    $region43: #{tpu_custom_call.1} parent=1 // pred_check_branch
      %320 = sbr.rel (0) target = $region45
    $region44: #{tpu_custom_call.1} parent=1 // pred_region
      %321 = dma.done [#allocation5], 256
    $region45: #{tpu_custom_call.1} parent=1 // pred_fallthru
      _
    %322 = vsyncpa [#allocation4], 1
    %323 = vsyncpa [#allocation7], 1
    %324 = vsyncpa [#allocation5], 1

</llo_original>
